<compile_context>
chip_gen: v7x
topology: tpu7x:2x2x1
jax: 0.10.0
libtpu: 0.0.40
codegen_flags: <defaults>
</compile_context>

<pallas_src>
import jax
import jax.numpy as jnp
from jax import lax
from jax.experimental import pallas as pl
from jax.experimental.pallas import tpu as pltpu

_MIB = 1024 * 1024


def _make_linear_kernel(precision):
    def _linear_kernel(x_ref, wt_ref, b_ref, out_ref):
        # x_ref: (TB, L) compute dtype, wt_ref: (L, 2) compute dtype, b_ref: (1, 2) f32
        acc = lax.dot_general(                    # x @ W.T, weight already (L, 2)
            x_ref[...], wt_ref[...],
            dimension_numbers=(((1,), (0,)), ((), ())),
            preferred_element_type=jnp.float32,
            precision=precision,
        )
        out_ref[...] = acc + b_ref[...]           # fused bias add, single store
    return _linear_kernel


def _vmem_capacity_bytes():
    # Trace-time hardware query; fall back to "unknown" (treated conservatively).
    try:
        info = pltpu.get_tpu_info()
        cap = getattr(info, "vmem_capacity_bytes", None)
        if isinstance(cap, int) and cap > 0:
            return cap
    except Exception:
        pass
    return None


def _round_up8(n):
    return ((n + 7) // 8) * 8


def _pick_batch_tile(batch, max_len, itemsize, vmem_capacity):
    """Byte-capped tile with >= ~4 grid steps so pipelining/megacore engage."""
    small_vmem = (vmem_capacity is None) or (vmem_capacity <= 64 * _MIB)
    budget_bytes = (10 if small_vmem else 16) * _MIB   # per x buffer (double-buffered)
    rows_by_bytes = budget_bytes // max(1, max_len * itemsize)
    rows_by_bytes = max(8, (rows_by_bytes // 8) * 8)    # byte cap only, 8-aligned

    if batch <= 8:
        return batch                                    # full-dim block => legal

    # Aim for >= 4 grid steps (cdiv(batch, 4) rows per tile, 8-aligned).
    rows_for_steps = max(8, _round_up8(-(-batch // 4)))
    tb = min(rows_by_bytes, rows_for_steps)
    if tb >= batch:
        return batch
    return tb


def dnn_forward(x, weight, bias, *, tile_batch=None):
    """Reproduces DNN.forward: returns (classification(x.float()), x.float()).

    x:      (batch, max_len)  float dtype (bf16 is fed to the MXU natively)
    weight: (2, max_len)      PyTorch nn.Linear layout
    bias:   (2,)
    """
    batch, max_len = x.shape
    assert weight.shape == (2, max_len)

    # ---- dtype / precision policy (hoisted, runs once in XLA) ----------------
    x_dtype = jnp.dtype(x.dtype)
    if x_dtype == jnp.bfloat16:
        compute_dtype = jnp.bfloat16                  # MXU-native, no VPU unpack
        precision = None                              # bf16 x bf16 -> f32 accum
    else:
        if x_dtype != jnp.float32:
            x = x.astype(jnp.float32)                 # mirrors torch .float()
        compute_dtype = jnp.float32
        precision = lax.Precision.HIGHEST             # avoid bf16 truncation on v5e/v6e

    wt = weight.T.astype(compute_dtype)               # (max_len, 2), prepped once
    b2d = bias.reshape(1, 2).astype(jnp.float32)

    # ---- tiling ---------------------------------------------------------------
    vmem_cap = _vmem_capacity_bytes()
    itemsize = jnp.dtype(compute_dtype).itemsize
    if tile_batch is not None:
        tb = min(tile_batch, batch)
        if tb < batch:
            tb = max(8, (tb // 8) * 8)                # keep block sublane-legal
    else:
        tb = _pick_batch_tile(batch, max_len, itemsize, vmem_cap)

    vmem_limit = 48 * _MIB if (vmem_cap is None or vmem_cap <= 64 * _MIB) else 64 * _MIB

    grid = (pl.cdiv(batch, tb),)

    out = pl.pallas_call(
        _make_linear_kernel(precision),
        out_shape=jax.ShapeDtypeStruct((batch, 2), jnp.float32),
        grid=grid,
        in_specs=[
            pl.BlockSpec((tb, max_len), lambda i: (i, 0)),    # x: tiled over batch
            pl.BlockSpec((max_len, 2), lambda i: (0, 0)),     # weight.T: resident
            pl.BlockSpec((1, 2), lambda i: (0, 0)),           # bias: resident
        ],
        out_specs=pl.BlockSpec((tb, 2), lambda i: (i, 0)),
        compiler_params=pltpu.CompilerParams(
            dimension_semantics=("parallel",),                # megacore split (v7x)
            vmem_limit_bytes=vmem_limit,
        ),
    )(x, wt, b2d)

    # Second return value matches PyTorch `x.float()`. Kept as a cheap XLA cast
    # (no-op when x is already f32).
    # TODO(synk): if callers consume x.float() with bf16 inputs, emit it as a
    # fused second kernel output from the resident tile to save ~25% HBM traffic.
    return out, x.astype(jnp.float32)


def init_params(key, max_len):
    # Deterministic init mimicking nn.Linear(max_len, 2):
    # U(-1/sqrt(max_len), +1/sqrt(max_len))
    kw, kb = jax.random.split(key)
    bound = 1.0 / (max_len ** 0.5)
    weight = jax.random.uniform(kw, (2, max_len), jnp.float32, -bound, bound)
    bias = jax.random.uniform(kb, (2,), jnp.float32, -bound, bound)
    return weight, bias


def _reference(x, weight, bias):
    return jnp.dot(x.astype(jnp.float32), weight.T.astype(jnp.float32),
                   precision=lax.Precision.HIGHEST) + bias.astype(jnp.float32)


if __name__ == "__main__":
    key = jax.random.PRNGKey(0)
    k_x, k_p, k_x2, k_x3, k_x4 = jax.random.split(key, 5)

    # TODO(synk): `.cuda()` device transfer has no Pallas equivalent; arrays are
    # already on the TPU device.

    # --- Test 1: tiny sanity shape (single tile, f32, HIGHEST precision) ---
    batch, max_len = 8, 32
    weight, bias = init_params(k_p, max_len)
    x = jax.random.normal(k_x, (batch, max_len), jnp.float32)
    out, x_out = dnn_forward(x, weight, bias)
    jax.block_until_ready((out, x_out))
    assert out.shape == (batch, 2) and x_out.shape == (batch, max_len)
    assert jnp.allclose(out, _reference(x, weight, bias), atol=1e-4, rtol=1e-4)
    assert jnp.allclose(x_out, x.astype(jnp.float32))

    # --- Test 2: ragged multi-tile grid (batch=20, tile_batch=8 -> grid=3) ---
    b2, l2 = 20, 128
    w2, bias2 = init_params(k_p, l2)
    x2 = jax.random.normal(k_x2, (b2, l2), jnp.float32)
    out2, _ = dnn_forward(x2, w2, bias2, tile_batch=8)
    jax.block_until_ready(out2)
    assert jnp.allclose(out2, _reference(x2, w2, bias2), atol=1e-4, rtol=1e-4)

    # --- Test 3: bf16 input fed natively to the MXU (no in-kernel cast) ---
    x3 = jax.random.normal(k_x3, (batch, max_len), jnp.float32).astype(jnp.bfloat16)
    out3, x3_out = dnn_forward(x3, weight, bias)
    jax.block_until_ready((out3, x3_out))
    assert x3_out.dtype == jnp.float32
    # Exact spec of the bf16 fast path: bf16 x * bf16-rounded weight, f32 accum.
    ref3_bf16w = _reference(x3, weight.astype(jnp.bfloat16), bias)
    assert jnp.allclose(out3, ref3_bf16w, atol=1e-4, rtol=1e-4)
    # And it stays close to the full-f32 reference (weight rounding only).
    assert jnp.allclose(out3, _reference(x3, weight, bias), atol=5e-2, rtol=5e-2)

    # --- Test 4: auto tiler picks >= ~4 grid steps (batch=96 -> tb=24, 4 tiles) ---
    b4, l4 = 96, 128
    w4, bias4 = init_params(k_p, l4)
    x4 = jax.random.normal(k_x4, (b4, l4), jnp.float32)
    out4, _ = dnn_forward(x4, w4, bias4)
    jax.block_until_ready(out4)
    assert jnp.allclose(out4, _reference(x4, w4, bias4), atol=1e-4, rtol=1e-4)

    print("KERNEL_OK")
</pallas_src>

<mosaic_0001>
module attributes {stable_mosaic.version = 11 : i64} {
  func.func @_linear_kernel(%arg0: i32, %arg1: memref<8x32xf32, #tpu.memory_space<vmem>>, %arg2: memref<32x2xf32, #tpu.memory_space<vmem>>, %arg3: memref<1x2xf32, #tpu.memory_space<vmem>>, %arg4: memref<8x2xf32, #tpu.memory_space<vmem>>) attributes {dimension_semantics = [#tpu.dimension_semantics<parallel>], iteration_bounds = array<i64: 1>, scalar_prefetch = 0 : i64, scratch_operands = 0 : i64, tpu.core_type = #tpu.core_type<tc>, window_params = [{transform_indices = @transform_0, window_bounds = array<i64: 8, 32>}, {pipeline_mode = #tpu.pipeline_mode<synchronous>, transform_indices = @transform_1, window_bounds = array<i64: 32, 2>}, {pipeline_mode = #tpu.pipeline_mode<synchronous>, transform_indices = @transform_2, window_bounds = array<i64: 1, 2>}, {transform_indices = @transform_3, window_bounds = array<i64: 8, 2>}]} {
    %c0 = arith.constant 0 : index
    %c0_0 = arith.constant 0 : index
    %0 = vector.load %arg1[%c0, %c0_0] : memref<8x32xf32, #tpu.memory_space<vmem>>, vector<8x32xf32>
    %c0_1 = arith.constant 0 : index
    %c0_2 = arith.constant 0 : index
    %1 = vector.load %arg2[%c0_1, %c0_2] : memref<32x2xf32, #tpu.memory_space<vmem>>, vector<32x2xf32>
    %cst = arith.constant dense<0.000000e+00> : vector<8x2xf32>
    %2 = tpu.matmul %0, %1, %cst {dimension_numbers = #tpu.dot_dimension_numbers<[1], [0], [0], [1], [0, 0, 1, 1], [], []>, precision = #tpu.contract_precision<fp32>} : vector<8x32xf32>, vector<32x2xf32>, vector<8x2xf32> -> vector<8x2xf32>
    %c0_3 = arith.constant 0 : index
    %c0_4 = arith.constant 0 : index
    %3 = vector.load %arg3[%c0_3, %c0_4] : memref<1x2xf32, #tpu.memory_space<vmem>>, vector<1x2xf32>
    %4 = vector.broadcast %3 : vector<1x2xf32> to vector<8x2xf32>
    %5 = arith.addf %2, %4 : vector<8x2xf32>
    %c0_5 = arith.constant 0 : index
    %c0_6 = arith.constant 0 : index
    %6 = vector.load %arg4[%c0_5, %c0_6] : memref<8x2xf32, #tpu.memory_space<vmem>>, vector<8x2xf32>
    tpu.vector_store %arg4[%c0_5, %c0_6], %5 {strides = array<i32>} : memref<8x2xf32, #tpu.memory_space<vmem>>, vector<8x2xf32>,
    return
  }
  func.func @transform_0(%arg0: i32) -> (i32, i32) {
    %c0_i32 = arith.constant 0 : i32
    %c0_i32_0 = arith.constant 0 : i32
    return %arg0, %c0_i32 : i32, i32
  }
  func.func @transform_1(%arg0: i32) -> (i32, i32) {
    %c0_i32 = arith.constant 0 : i32
    %c0_i32_0 = arith.constant 0 : i32
    %c0_i32_1 = arith.constant 0 : i32
    return %c0_i32, %c0_i32_0 : i32, i32
  }
  func.func @transform_2(%arg0: i32) -> (i32, i32) {
    %c0_i32 = arith.constant 0 : i32
    %c0_i32_0 = arith.constant 0 : i32
    %c0_i32_1 = arith.constant 0 : i32
    return %c0_i32, %c0_i32_0 : i32, i32
  }
  func.func @transform_3(%arg0: i32) -> (i32, i32) {
    %c0_i32 = arith.constant 0 : i32
    %c0_i32_0 = arith.constant 0 : i32
    return %arg0, %c0_i32 : i32, i32
  }
}

</mosaic_0001>

<llo_original>
// kernel: tpu_custom_call.1
$region0: #{tpu_custom_call.1}
  #allocation0 [shape = 'u32[]', space=smem, size = 0x4, offset = 0x4, fixed_abs, tag = 'smem constant byte address 0x4 - core index']
  #allocation1 [shape = 'u32[144,128]{1,0:T(1,128)}', space=vmem, size = 0x12000, scoped, tag = 'internal scratch']
  %s0 = inlined_call_operand.vmem [shape: f32[8,32], index: 0, kind: input, shape index: {}]
  %s1 = inlined_call_operand.vmem [shape: f32[32,2], index: 1, kind: input, shape index: {}]
  %s2 = inlined_call_operand.vmem [shape: f32[1,2], index: 2, kind: input, shape index: {}]
  %s3 = inlined_call_operand.vmem [shape: f32[8,2], index: 3, kind: output, shape index: {}]
  %s4 = sld [smem:[#allocation0]]
  $region22: #{tpu_custom_call.1} parent=0
    _
  %s6 = ssub.s32 1, %s4
  %s7 = scalar_select 0, %s6, %s4
  // Predicated region
  $region2: #{tpu_custom_call.1} parent=0 // pred_check
    _
  $region3: #{tpu_custom_call.1} parent=0 // pred_check_branch
    %9 = sbr.rel (0) target = $region5
  $region4: #{tpu_custom_call.1} parent=0 // pred_region
    _
  $region5: #{tpu_custom_call.1} parent=0 // pred_fallthru
    _
  // Predicated region
  $region6: #{tpu_custom_call.1} parent=0 // pred_check
    _
  $region7: #{tpu_custom_call.1} parent=0 // pred_check_branch
    %11 = sbr.rel (0) target = $region9
  $region8: #{tpu_custom_call.1} parent=0 // pred_region
    _
  $region9: #{tpu_custom_call.1} parent=0 // pred_fallthru
    _
  // Predicated region
  $region10: #{tpu_custom_call.1} parent=0 // pred_check
    _
  $region11: #{tpu_custom_call.1} parent=0 // pred_check_branch
    %13 = sbr.rel (0) target = $region13
  $region12: #{tpu_custom_call.1} parent=0 // pred_region
    _
  $region13: #{tpu_custom_call.1} parent=0 // pred_fallthru
    _
  %v14 = vld [vmem:[%s0] sm:$0xff]
  %v15 = vld [vmem:[%s1] sm:$0xff]
  %v16 = vld [vmem:[%s1 + $0x8] sm:$0xff]
  %v17 = vld [vmem:[%s1 + $0x10] sm:$0xff]
  %v18 = vld [vmem:[%s1 + $0x18] sm:$0xff]
  %v19 = vld [vmem:[%s2] sm:$0x1]
  %v21 = vlaneseq
  %v22 = vshrl.u32 %v21, 7
  %v23 = vsub.s32 0, %v22
  %v24 = vrot.slane %v19, %v23
  %vm26 = vcmask 261120
  %v28 = vsel %vm26, %v14, 0
  %30 = vmatprep.subr.mxu0 0.0
  %v31 = vand.u32 %v15, 4294901760
  %32 = vmatpush1.msra.mxu0 %v31
  %33 = vmatprep.subr.mxu0 0.0
  %v34 = vand.u32 %v16, 4294901760
  %35 = vmatpush1.msra.mxu0 %v34
  %36 = vmatprep.subr.mxu0 0.0
  %v37 = vand.u32 %v17, 4294901760
  %38 = vmatpush1.msra.mxu0 %v37
  %39 = vmatprep.subr.mxu0 0.0
  %v40 = vand.u32 %v18, 4294901760
  %41 = vmatpush1.msra.mxu0 %v40
  %42 = vmatprep.subr.mxu0 0.0
  %43 = vmatpush1.msra.mxu0 0.0
  %44 = vmatprep.subr.mxu0 0.0
  %45 = vmatpush1.msra.mxu0 0.0
  %46 = vmatprep.subr.mxu0 0.0
  %47 = vmatpush1.msra.mxu0 0.0
  %48 = vmatprep.subr.mxu0 0.0
  %49 = vmatpush1.msra.mxu0 0.0
  %50 = vmatprep.subr.mxu0 0.0
  %51 = vmatpush1.msra.mxu0 0.0
  %52 = vmatprep.subr.mxu0 0.0
  %53 = vmatpush1.msra.mxu0 0.0
  %54 = vmatprep.subr.mxu0 0.0
  %55 = vmatpush1.msra.mxu0 0.0
  %56 = vmatprep.subr.mxu0 0.0
  %57 = vmatpush1.msra.mxu0 0.0
  %58 = vmatprep.subr.mxu0 0.0
  %59 = vmatpush1.msra.mxu0 0.0
  %60 = vmatprep.subr.mxu0 0.0
  %61 = vmatpush1.msra.mxu0 0.0
  %62 = vmatprep.subr.mxu0 0.0
  %63 = vmatpush1.msra.mxu0 0.0
  %64 = vmatprep.subr.mxu0 0.0
  %65 = vmatpush1.msra.mxu0 0.0
  %66 = vmatprep.subr.mxu0 0.0
  %67 = vmatpush1.msra.mxu0 0.0
  %68 = vmatprep.subr.mxu0 0.0
  %69 = vmatpush1.msra.mxu0 0.0
  %70 = vmatprep.subr.mxu0 0.0
  %71 = vmatpush1.msra.mxu0 0.0
  %72 = vmatprep.subr.mxu0 0.0
  %73 = vmatpush1.msra.mxu0 0.0
  %74 = vmatprep.subr.mxu0 0.0
  %75 = vmatpush1.msra.mxu0 0.0
  %76 = vmatprep.subr.mxu0 0.0
  %77 = vmatpush1.msra.mxu0 0.0
  %78 = vmatprep.subr.mxu0 0.0
  %79 = vmatpush1.msra.mxu0 0.0
  %80 = vmatprep.subr.mxu0 0.0
  %81 = vmatpush1.msra.mxu0 0.0
  %82 = vmatprep.subr.mxu0 0.0
  %83 = vmatpush1.msra.mxu0 0.0
  %84 = vmatprep.subr.mxu0 0.0
  %85 = vmatpush1.msra.mxu0 0.0
  %86 = vmatprep.subr.mxu0 0.0
  %87 = vmatpush1.msra.mxu0 0.0
  %88 = vmatprep.subr.mxu0 0.0
  %89 = vmatpush1.msra.mxu0 0.0
  %90 = vmatprep.subr.mxu0 0.0
  %91 = vmatpush1.msra.mxu0 0.0
  %92 = vmatprep.subr.mxu0 0.0
  %93 = vmatpush1.msra.mxu0 0.0
  %94 = vmatprep.subr.mxu0 0.0
  %95 = vmatpush1.msra.mxu0 0.0
  %96 = vmatprep.subr.mxu0 0.0
  %97 = vmatpush1.msra.mxu0 0.0
  %98 = vmatprep.mubr.f32.mxu0 0.0
  %v99 = vand.u32 %v28, 4294901760
  %v100 = vsub.f32 %v28, %v99
  %v101 = vand.u32 %v100, 4294901760
  %v102 = vsub.f32 %v100, %v101
  %v103 = vand.u32 %v102, 4294901760
  %104 = vmatmul.mubr.f32.gmra.mrb[0].mxu0 %v103
  %v105 = vpop.f32.mrb[0].mxu0
  %v106 = vadd.f32 %v24, %v105
  %v107 = vpop.f32.mrb[0].mxu0
  %108 = vdwg.mxu0
  %109 = vmatprep.subr.mxu0 0.0
  %v110 = vand.u32 %v15, 4294901760
  %v111 = vsub.f32 %v15, %v110
  %v112 = vand.u32 %v111, 4294901760
  %v113 = vsub.f32 %v111, %v112
  %v114 = vand.u32 %v113, 4294901760
  %115 = vmatpush1.msra.mxu0 %v114
  %116 = vmatprep.subr.mxu0 0.0
  %v117 = vand.u32 %v16, 4294901760
  %v118 = vsub.f32 %v16, %v117
  %v119 = vand.u32 %v118, 4294901760
  %v120 = vsub.f32 %v118, %v119
  %v121 = vand.u32 %v120, 4294901760
  %122 = vmatpush1.msra.mxu0 %v121
  %123 = vmatprep.subr.mxu0 0.0
  %v124 = vand.u32 %v17, 4294901760
  %v125 = vsub.f32 %v17, %v124
  %v126 = vand.u32 %v125, 4294901760
  %v127 = vsub.f32 %v125, %v126
  %v128 = vand.u32 %v127, 4294901760
  %129 = vmatpush1.msra.mxu0 %v128
  %130 = vmatprep.subr.mxu0 0.0
  %v131 = vand.u32 %v18, 4294901760
  %v132 = vsub.f32 %v18, %v131
  %v133 = vand.u32 %v132, 4294901760
  %v134 = vsub.f32 %v132, %v133
  %v135 = vand.u32 %v134, 4294901760
  %136 = vmatpush1.msra.mxu0 %v135
  %137 = vmatprep.subr.mxu0 0.0
  %138 = vmatpush1.msra.mxu0 0.0
  %139 = vmatprep.subr.mxu0 0.0
  %140 = vmatpush1.msra.mxu0 0.0
  %141 = vmatprep.subr.mxu0 0.0
  %142 = vmatpush1.msra.mxu0 0.0
  %143 = vmatprep.subr.mxu0 0.0
  %144 = vmatpush1.msra.mxu0 0.0
  %145 = vmatprep.subr.mxu0 0.0
  %146 = vmatpush1.msra.mxu0 0.0
  %147 = vmatprep.subr.mxu0 0.0
  %148 = vmatpush1.msra.mxu0 0.0
  %149 = vmatprep.subr.mxu0 0.0
  %150 = vmatpush1.msra.mxu0 0.0
  %151 = vmatprep.subr.mxu0 0.0
  %152 = vmatpush1.msra.mxu0 0.0
  %153 = vmatprep.subr.mxu0 0.0
  %154 = vmatpush1.msra.mxu0 0.0
  %155 = vmatprep.subr.mxu0 0.0
  %156 = vmatpush1.msra.mxu0 0.0
  %157 = vmatprep.subr.mxu0 0.0
  %158 = vmatpush1.msra.mxu0 0.0
  %159 = vmatprep.subr.mxu0 0.0
  %160 = vmatpush1.msra.mxu0 0.0
  %161 = vmatprep.subr.mxu0 0.0
  %162 = vmatpush1.msra.mxu0 0.0
  %163 = vmatprep.subr.mxu0 0.0
  %164 = vmatpush1.msra.mxu0 0.0
  %165 = vmatprep.subr.mxu0 0.0
  %166 = vmatpush1.msra.mxu0 0.0
  %167 = vmatprep.subr.mxu0 0.0
  %168 = vmatpush1.msra.mxu0 0.0
  %169 = vmatprep.subr.mxu0 0.0
  %170 = vmatpush1.msra.mxu0 0.0
  %171 = vmatprep.subr.mxu0 0.0
  %172 = vmatpush1.msra.mxu0 0.0
  %173 = vmatprep.subr.mxu0 0.0
  %174 = vmatpush1.msra.mxu0 0.0
  %175 = vmatprep.subr.mxu0 0.0
  %176 = vmatpush1.msra.mxu0 0.0
  %177 = vmatprep.subr.mxu0 0.0
  %178 = vmatpush1.msra.mxu0 0.0
  %179 = vmatprep.subr.mxu0 0.0
  %180 = vmatpush1.msra.mxu0 0.0
  %181 = vmatprep.subr.mxu0 0.0
  %182 = vmatpush1.msra.mxu0 0.0
  %183 = vmatprep.subr.mxu0 0.0
  %184 = vmatpush1.msra.mxu0 0.0
  %185 = vmatprep.subr.mxu0 0.0
  %186 = vmatpush1.msra.mxu0 0.0
  %187 = vmatprep.subr.mxu0 0.0
  %188 = vmatpush1.msra.mxu0 0.0
  %189 = vmatprep.subr.mxu0 0.0
  %190 = vmatpush1.msra.mxu0 0.0
  %191 = vmatprep.subr.mxu0 0.0
  %192 = vmatpush1.msra.mxu0 0.0
  %193 = vmatprep.mubr.f32.mxu0 0.0
  %v194 = vand.u32 %v28, 4294901760
  %195 = vmatmul.mubr.f32.gmra.mrb[0].mxu0 %v194
  %v196 = vpop.f32.mrb[0].mxu0
  %v197 = vadd.f32 %v106, %v196
  %v198 = vpop.f32.mrb[0].mxu0
  %199 = vdwg.mxu0
  %200 = vmatprep.subr.mxu0 0.0
  %v201 = vand.u32 %v15, 4294901760
  %v202 = vsub.f32 %v15, %v201
  %203 = vmatpush1.msra.mxu0 %v202
  %204 = vmatprep.subr.mxu0 0.0
  %v205 = vand.u32 %v16, 4294901760
  %v206 = vsub.f32 %v16, %v205
  %207 = vmatpush1.msra.mxu0 %v206
  %208 = vmatprep.subr.mxu0 0.0
  %v209 = vand.u32 %v17, 4294901760
  %v210 = vsub.f32 %v17, %v209
  %211 = vmatpush1.msra.mxu0 %v210
  %212 = vmatprep.subr.mxu0 0.0
  %v213 = vand.u32 %v18, 4294901760
  %v214 = vsub.f32 %v18, %v213
  %215 = vmatpush1.msra.mxu0 %v214
  %216 = vmatprep.subr.mxu0 0.0
  %217 = vmatpush1.msra.mxu0 0.0
  %218 = vmatprep.subr.mxu0 0.0
  %219 = vmatpush1.msra.mxu0 0.0
  %220 = vmatprep.subr.mxu0 0.0
  %221 = vmatpush1.msra.mxu0 0.0
  %222 = vmatprep.subr.mxu0 0.0
  %223 = vmatpush1.msra.mxu0 0.0
  %224 = vmatprep.subr.mxu0 0.0
  %225 = vmatpush1.msra.mxu0 0.0
  %226 = vmatprep.subr.mxu0 0.0
  %227 = vmatpush1.msra.mxu0 0.0
  %228 = vmatprep.subr.mxu0 0.0
  %229 = vmatpush1.msra.mxu0 0.0
  %230 = vmatprep.subr.mxu0 0.0
  %231 = vmatpush1.msra.mxu0 0.0
  %232 = vmatprep.subr.mxu0 0.0
  %233 = vmatpush1.msra.mxu0 0.0
  %234 = vmatprep.subr.mxu0 0.0
  %235 = vmatpush1.msra.mxu0 0.0
  %236 = vmatprep.subr.mxu0 0.0
  %237 = vmatpush1.msra.mxu0 0.0
  %238 = vmatprep.subr.mxu0 0.0
  %239 = vmatpush1.msra.mxu0 0.0
  %240 = vmatprep.subr.mxu0 0.0
  %241 = vmatpush1.msra.mxu0 0.0
  %242 = vmatprep.subr.mxu0 0.0
  %243 = vmatpush1.msra.mxu0 0.0
  %244 = vmatprep.subr.mxu0 0.0
  %245 = vmatpush1.msra.mxu0 0.0
  %246 = vmatprep.subr.mxu0 0.0
  %247 = vmatpush1.msra.mxu0 0.0
  %248 = vmatprep.subr.mxu0 0.0
  %249 = vmatpush1.msra.mxu0 0.0
  %250 = vmatprep.subr.mxu0 0.0
  %251 = vmatpush1.msra.mxu0 0.0
  %252 = vmatprep.subr.mxu0 0.0
  %253 = vmatpush1.msra.mxu0 0.0
  %254 = vmatprep.subr.mxu0 0.0
  %255 = vmatpush1.msra.mxu0 0.0
  %256 = vmatprep.subr.mxu0 0.0
  %257 = vmatpush1.msra.mxu0 0.0
  %258 = vmatprep.subr.mxu0 0.0
  %259 = vmatpush1.msra.mxu0 0.0
  %260 = vmatprep.subr.mxu0 0.0
  %261 = vmatpush1.msra.mxu0 0.0
  %262 = vmatprep.subr.mxu0 0.0
  %263 = vmatpush1.msra.mxu0 0.0
  %264 = vmatprep.subr.mxu0 0.0
  %265 = vmatpush1.msra.mxu0 0.0
  %266 = vmatprep.subr.mxu0 0.0
  %267 = vmatpush1.msra.mxu0 0.0
  %268 = vmatprep.subr.mxu0 0.0
  %269 = vmatpush1.msra.mxu0 0.0
  %270 = vmatprep.subr.mxu0 0.0
  %271 = vmatpush1.msra.mxu0 0.0
  %272 = vmatprep.mubr.f32.mxu0 0.0
  %v273 = vand.u32 %v28, 4294901760
  %v274 = vsub.f32 %v28, %v273
  %275 = vmatmul.mubr.f32.gmra.mrb[0].mxu0 %v274
  %v276 = vpop.f32.mrb[0].mxu0
  %v277 = vadd.f32 %v197, %v276
  %v278 = vpop.f32.mrb[0].mxu0
  %279 = vdwg.mxu0
  %280 = vmatprep.subr.mxu0 0.0
  %v281 = vand.u32 %v15, 4294901760
  %282 = vmatpush1.msra.mxu0 %v281
  %283 = vmatprep.subr.mxu0 0.0
  %v284 = vand.u32 %v16, 4294901760
  %285 = vmatpush1.msra.mxu0 %v284
  %286 = vmatprep.subr.mxu0 0.0
  %v287 = vand.u32 %v17, 4294901760
  %288 = vmatpush1.msra.mxu0 %v287
  %289 = vmatprep.subr.mxu0 0.0
  %v290 = vand.u32 %v18, 4294901760
  %291 = vmatpush1.msra.mxu0 %v290
  %292 = vmatprep.subr.mxu0 0.0
  %293 = vmatpush1.msra.mxu0 0.0
  %294 = vmatprep.subr.mxu0 0.0
  %295 = vmatpush1.msra.mxu0 0.0
  %296 = vmatprep.subr.mxu0 0.0
  %297 = vmatpush1.msra.mxu0 0.0
  %298 = vmatprep.subr.mxu0 0.0
  %299 = vmatpush1.msra.mxu0 0.0
  %300 = vmatprep.subr.mxu0 0.0
  %301 = vmatpush1.msra.mxu0 0.0
  %302 = vmatprep.subr.mxu0 0.0
  %303 = vmatpush1.msra.mxu0 0.0
  %304 = vmatprep.subr.mxu0 0.0
  %305 = vmatpush1.msra.mxu0 0.0
  %306 = vmatprep.subr.mxu0 0.0
  %307 = vmatpush1.msra.mxu0 0.0
  %308 = vmatprep.subr.mxu0 0.0
  %309 = vmatpush1.msra.mxu0 0.0
  %310 = vmatprep.subr.mxu0 0.0
  %311 = vmatpush1.msra.mxu0 0.0
  %312 = vmatprep.subr.mxu0 0.0
  %313 = vmatpush1.msra.mxu0 0.0
  %314 = vmatprep.subr.mxu0 0.0
  %315 = vmatpush1.msra.mxu0 0.0
  %316 = vmatprep.subr.mxu0 0.0
  %317 = vmatpush1.msra.mxu0 0.0
  %318 = vmatprep.subr.mxu0 0.0
  %319 = vmatpush1.msra.mxu0 0.0
  %320 = vmatprep.subr.mxu0 0.0
  %321 = vmatpush1.msra.mxu0 0.0
  %322 = vmatprep.subr.mxu0 0.0
  %323 = vmatpush1.msra.mxu0 0.0
  %324 = vmatprep.subr.mxu0 0.0
  %325 = vmatpush1.msra.mxu0 0.0
  %326 = vmatprep.subr.mxu0 0.0
  %327 = vmatpush1.msra.mxu0 0.0
  %328 = vmatprep.subr.mxu0 0.0
  %329 = vmatpush1.msra.mxu0 0.0
  %330 = vmatprep.subr.mxu0 0.0
  %331 = vmatpush1.msra.mxu0 0.0
  %332 = vmatprep.subr.mxu0 0.0
  %333 = vmatpush1.msra.mxu0 0.0
  %334 = vmatprep.subr.mxu0 0.0
  %335 = vmatpush1.msra.mxu0 0.0
  %336 = vmatprep.subr.mxu0 0.0
  %337 = vmatpush1.msra.mxu0 0.0
  %338 = vmatprep.subr.mxu0 0.0
  %339 = vmatpush1.msra.mxu0 0.0
  %340 = vmatprep.subr.mxu0 0.0
  %341 = vmatpush1.msra.mxu0 0.0
  %342 = vmatprep.subr.mxu0 0.0
  %343 = vmatpush1.msra.mxu0 0.0
  %344 = vmatprep.subr.mxu0 0.0
  %345 = vmatpush1.msra.mxu0 0.0
  %346 = vmatprep.subr.mxu0 0.0
  %347 = vmatpush1.msra.mxu0 0.0
  %348 = vmatprep.mubr.f32.mxu0 0.0
  %v349 = vand.u32 %v28, 4294901760
  %v350 = vsub.f32 %v28, %v349
  %v351 = vand.u32 %v350, 4294901760
  %352 = vmatmul.mubr.f32.gmra.mrb[0].mxu0 %v351
  %v353 = vpop.f32.mrb[0].mxu0
  %v354 = vadd.f32 %v277, %v353
  %v355 = vpop.f32.mrb[0].mxu0
  %356 = vdwg.mxu0
  %357 = vmatprep.subr.mxu0 0.0
  %v358 = vand.u32 %v15, 4294901760
  %v359 = vsub.f32 %v15, %v358
  %v360 = vand.u32 %v359, 4294901760
  %361 = vmatpush1.msra.mxu0 %v360
  %362 = vmatprep.subr.mxu0 0.0
  %v363 = vand.u32 %v16, 4294901760
  %v364 = vsub.f32 %v16, %v363
  %v365 = vand.u32 %v364, 4294901760
  %366 = vmatpush1.msra.mxu0 %v365
  %367 = vmatprep.subr.mxu0 0.0
  %v368 = vand.u32 %v17, 4294901760
  %v369 = vsub.f32 %v17, %v368
  %v370 = vand.u32 %v369, 4294901760
  %371 = vmatpush1.msra.mxu0 %v370
  %372 = vmatprep.subr.mxu0 0.0
  %v373 = vand.u32 %v18, 4294901760
  %v374 = vsub.f32 %v18, %v373
  %v375 = vand.u32 %v374, 4294901760
  %376 = vmatpush1.msra.mxu0 %v375
  %377 = vmatprep.subr.mxu0 0.0
  %378 = vmatpush1.msra.mxu0 0.0
  %379 = vmatprep.subr.mxu0 0.0
  %380 = vmatpush1.msra.mxu0 0.0
  %381 = vmatprep.subr.mxu0 0.0
  %382 = vmatpush1.msra.mxu0 0.0
  %383 = vmatprep.subr.mxu0 0.0
  %384 = vmatpush1.msra.mxu0 0.0
  %385 = vmatprep.subr.mxu0 0.0
  %386 = vmatpush1.msra.mxu0 0.0
  %387 = vmatprep.subr.mxu0 0.0
  %388 = vmatpush1.msra.mxu0 0.0
  %389 = vmatprep.subr.mxu0 0.0
  %390 = vmatpush1.msra.mxu0 0.0
  %391 = vmatprep.subr.mxu0 0.0
  %392 = vmatpush1.msra.mxu0 0.0
  %393 = vmatprep.subr.mxu0 0.0
  %394 = vmatpush1.msra.mxu0 0.0
  %395 = vmatprep.subr.mxu0 0.0
  %396 = vmatpush1.msra.mxu0 0.0
  %397 = vmatprep.subr.mxu0 0.0
  %398 = vmatpush1.msra.mxu0 0.0
  %399 = vmatprep.subr.mxu0 0.0
  %400 = vmatpush1.msra.mxu0 0.0
  %401 = vmatprep.subr.mxu0 0.0
  %402 = vmatpush1.msra.mxu0 0.0
  %403 = vmatprep.subr.mxu0 0.0
  %404 = vmatpush1.msra.mxu0 0.0
  %405 = vmatprep.subr.mxu0 0.0
  %406 = vmatpush1.msra.mxu0 0.0
  %407 = vmatprep.subr.mxu0 0.0
  %408 = vmatpush1.msra.mxu0 0.0
  %409 = vmatprep.subr.mxu0 0.0
  %410 = vmatpush1.msra.mxu0 0.0
  %411 = vmatprep.subr.mxu0 0.0
  %412 = vmatpush1.msra.mxu0 0.0
  %413 = vmatprep.subr.mxu0 0.0
  %414 = vmatpush1.msra.mxu0 0.0
  %415 = vmatprep.subr.mxu0 0.0
  %416 = vmatpush1.msra.mxu0 0.0
  %417 = vmatprep.subr.mxu0 0.0
  %418 = vmatpush1.msra.mxu0 0.0
  %419 = vmatprep.subr.mxu0 0.0
  %420 = vmatpush1.msra.mxu0 0.0
  %421 = vmatprep.subr.mxu0 0.0
  %422 = vmatpush1.msra.mxu0 0.0
  %423 = vmatprep.subr.mxu0 0.0
  %424 = vmatpush1.msra.mxu0 0.0
  %425 = vmatprep.subr.mxu0 0.0
  %426 = vmatpush1.msra.mxu0 0.0
  %427 = vmatprep.subr.mxu0 0.0
  %428 = vmatpush1.msra.mxu0 0.0
  %429 = vmatprep.subr.mxu0 0.0
  %430 = vmatpush1.msra.mxu0 0.0
  %431 = vmatprep.subr.mxu0 0.0
  %432 = vmatpush1.msra.mxu0 0.0
  %433 = vmatprep.mubr.f32.mxu0 0.0
  %v434 = vand.u32 %v28, 4294901760
  %435 = vmatmul.mubr.f32.gmra.mrb[0].mxu0 %v434
  %v436 = vpop.f32.mrb[0].mxu0
  %v437 = vadd.f32 %v354, %v436
  %v438 = vpop.f32.mrb[0].mxu0
  %439 = vdwg.mxu0
  %440 = vmatprep.subr.mxu0 0.0
  %v441 = vand.u32 %v15, 4294901760
  %442 = vmatpush1.msra.mxu0 %v441
  %443 = vmatprep.subr.mxu0 0.0
  %v444 = vand.u32 %v16, 4294901760
  %445 = vmatpush1.msra.mxu0 %v444
  %446 = vmatprep.subr.mxu0 0.0
  %v447 = vand.u32 %v17, 4294901760
  %448 = vmatpush1.msra.mxu0 %v447
  %449 = vmatprep.subr.mxu0 0.0
  %v450 = vand.u32 %v18, 4294901760
  %451 = vmatpush1.msra.mxu0 %v450
  %452 = vmatprep.subr.mxu0 0.0
  %453 = vmatpush1.msra.mxu0 0.0
  %454 = vmatprep.subr.mxu0 0.0
  %455 = vmatpush1.msra.mxu0 0.0
  %456 = vmatprep.subr.mxu0 0.0
  %457 = vmatpush1.msra.mxu0 0.0
  %458 = vmatprep.subr.mxu0 0.0
  %459 = vmatpush1.msra.mxu0 0.0
  %460 = vmatprep.subr.mxu0 0.0
  %461 = vmatpush1.msra.mxu0 0.0
  %462 = vmatprep.subr.mxu0 0.0
  %463 = vmatpush1.msra.mxu0 0.0
  %464 = vmatprep.subr.mxu0 0.0
  %465 = vmatpush1.msra.mxu0 0.0
  %466 = vmatprep.subr.mxu0 0.0
  %467 = vmatpush1.msra.mxu0 0.0
  %468 = vmatprep.subr.mxu0 0.0
  %469 = vmatpush1.msra.mxu0 0.0
  %470 = vmatprep.subr.mxu0 0.0
  %471 = vmatpush1.msra.mxu0 0.0
  %472 = vmatprep.subr.mxu0 0.0
  %473 = vmatpush1.msra.mxu0 0.0
  %474 = vmatprep.subr.mxu0 0.0
  %475 = vmatpush1.msra.mxu0 0.0
  %476 = vmatprep.subr.mxu0 0.0
  %477 = vmatpush1.msra.mxu0 0.0
  %478 = vmatprep.subr.mxu0 0.0
  %479 = vmatpush1.msra.mxu0 0.0
  %480 = vmatprep.subr.mxu0 0.0
  %481 = vmatpush1.msra.mxu0 0.0
  %482 = vmatprep.subr.mxu0 0.0
  %483 = vmatpush1.msra.mxu0 0.0
  %484 = vmatprep.subr.mxu0 0.0
  %485 = vmatpush1.msra.mxu0 0.0
  %486 = vmatprep.subr.mxu0 0.0
  %487 = vmatpush1.msra.mxu0 0.0
  %488 = vmatprep.subr.mxu0 0.0
  %489 = vmatpush1.msra.mxu0 0.0
  %490 = vmatprep.subr.mxu0 0.0
  %491 = vmatpush1.msra.mxu0 0.0
  %492 = vmatprep.subr.mxu0 0.0
  %493 = vmatpush1.msra.mxu0 0.0
  %494 = vmatprep.subr.mxu0 0.0
  %495 = vmatpush1.msra.mxu0 0.0
  %496 = vmatprep.subr.mxu0 0.0
  %497 = vmatpush1.msra.mxu0 0.0
  %498 = vmatprep.subr.mxu0 0.0
  %499 = vmatpush1.msra.mxu0 0.0
  %500 = vmatprep.subr.mxu0 0.0
  %501 = vmatpush1.msra.mxu0 0.0
  %502 = vmatprep.subr.mxu0 0.0
  %503 = vmatpush1.msra.mxu0 0.0
  %504 = vmatprep.subr.mxu0 0.0
  %505 = vmatpush1.msra.mxu0 0.0
  %506 = vmatprep.subr.mxu0 0.0
  %507 = vmatpush1.msra.mxu0 0.0
  %508 = vmatprep.mubr.f32.mxu0 0.0
  %v509 = vand.u32 %v28, 4294901760
  %510 = vmatmul.mubr.f32.gmra.mrb[0].mxu0 %v509
  %v511 = vpop.f32.mrb[0].mxu0
  %v512 = vadd.f32 %v437, %v511
  %v513 = vpop.f32.mrb[0].mxu0
  %514 = vdwg.mxu0
  %vm515 = vcmask 15360
  %516 = vst.msk [vmem:[%s3] sm:$0xff] %vm515, %v512
  // Predicated region
  $region14: #{tpu_custom_call.1} parent=0 // pred_check
    _
  $region15: #{tpu_custom_call.1} parent=0 // pred_check_branch
    %518 = sbr.rel (0) target = $region17
  $region16: #{tpu_custom_call.1} parent=0 // pred_region
    _
  $region17: #{tpu_custom_call.1} parent=0 // pred_fallthru
    _
  // Predicated region
  $region18: #{tpu_custom_call.1} parent=0 // pred_check
    _
  $region19: #{tpu_custom_call.1} parent=0 // pred_check_branch
    %520 = sbr.rel (0) target = $region21
  $region20: #{tpu_custom_call.1} parent=0 // pred_region
    _
  $region21: #{tpu_custom_call.1} parent=0 // pred_fallthru
    _

</llo_original>
